<compile_context>
chip_gen: v7x
topology: tpu7x:2x2x1
jax: 0.10.0
libtpu: 0.0.40
codegen_flags: <defaults>
</compile_context>

<pallas_src>
import jax
import jax.numpy as jnp
from jax.experimental import pallas as pl
from jax.experimental.pallas import tpu as pltpu


def _round_up(x, m):
    return (x + m - 1) // m * m


def _ppg_kernel(x_ref, wr_ref, br_ref, w1_ref, b1_ref, w2_ref, b2_ref, out_ref):
    """Fused forward: packed 3-branch representation + packed heads.

    Output lanes = [ state (rep_dim) | logits (action_dim) | value | aux | zero pad ].
    The slab is produced directly by the last matmul (identity blocks route the actor
    representation into lanes [0, rep_dim)), so there is no in-kernel concatenate and
    the store is a single unmasked, lane-dense write.
    """
    x = x_ref[...]

    # Packed representations: [actor_rep | critic_rep | aux_rep].
    rep = jnp.dot(x, wr_ref[...], preferred_element_type=jnp.float32) + br_ref[...]
    rep = jnp.maximum(rep, 0.0)

    # Packed head hidden layers + actor-rep pass-through:
    #   [actor_rep | actor_h | critic_h | aux_h].
    # ReLU is a no-op on the pass-through lanes (rep >= 0 already).
    h = jnp.dot(rep.astype(w1_ref.dtype), w1_ref[...],
                preferred_element_type=jnp.float32) + b1_ref[...]
    h = jnp.maximum(h, 0.0)

    # Packed head output layers + identity routing actor_rep -> lanes [0, rep_dim):
    # the result is the full output slab. Epilogue (bias add) stays in f32; cast only
    # at the final store.
    out = jnp.dot(h.astype(w2_ref.dtype), w2_ref[...],
                  preferred_element_type=jnp.float32) + b2_ref[...]
    out_ref[...] = out.astype(out_ref.dtype)


def pack_ppg_params(params, compute_dtype=jnp.float32):
    """Build the packed weight matrices ONCE (cache per parameter update).

    Handles separate (diverged) representation weights if the optional keys
    'critic_rep_w'/'critic_rep_b'/'aux_rep_w'/'aux_rep_b' are present; otherwise the
    deepcopy-at-init semantics (identical representation weights) are assumed.
    """
    compute_dtype = jnp.dtype(compute_dtype)

    rep_w_a, rep_b_a = params["rep_w"], params["rep_b"]
    rep_w_c = params.get("critic_rep_w", rep_w_a)
    rep_b_c = params.get("critic_rep_b", rep_b_a)
    rep_w_x = params.get("aux_rep_w", rep_w_a)
    rep_b_x = params.get("aux_rep_b", rep_b_a)

    obs_dim, rep_dim = rep_w_a.shape
    ah = params["actor_w1"].shape[1]
    ch = params["critic_w1"].shape[1]
    xh = params["aux_w1"].shape[1]
    action_dim = params["actor_w2"].shape[1]

    wide = rep_dim + ah + ch + xh                 # hidden width of matmul #2
    used = action_dim + 2                         # logits + value + aux
    out_width = _round_up(rep_dim + used, 128)    # lane-dense output slab width

    eye = jnp.eye(rep_dim, dtype=jnp.float32)

    # Matmul #1: column-packed representations [actor | critic | aux].
    wr = jnp.concatenate([rep_w_a, rep_w_c, rep_w_x], axis=1)
    br = jnp.concatenate([rep_b_a, rep_b_c, rep_b_x], axis=1).astype(jnp.float32)

    # Matmul #2: actor-rep pass-through (identity, valid since rep >= 0) + head layer 1.
    w1 = jnp.zeros((3 * rep_dim, wide), jnp.float32)
    w1 = w1.at[:rep_dim, :rep_dim].set(eye)
    w1 = w1.at[:rep_dim, rep_dim:rep_dim + ah].set(params["actor_w1"])
    w1 = w1.at[rep_dim:2 * rep_dim, rep_dim + ah:rep_dim + ah + ch].set(params["critic_w1"])
    w1 = w1.at[2 * rep_dim:, rep_dim + ah + ch:].set(params["aux_w1"])
    b1 = jnp.zeros((1, wide), jnp.float32)
    b1 = b1.at[:, rep_dim:rep_dim + ah].set(params["actor_b1"])
    b1 = b1.at[:, rep_dim + ah:rep_dim + ah + ch].set(params["critic_b1"])
    b1 = b1.at[:, rep_dim + ah + ch:].set(params["aux_b1"])

    # Matmul #3: actor-rep routed to lanes [0, rep_dim) + block-diagonal head layer 2.
    w2 = jnp.zeros((wide, out_width), jnp.float32)
    w2 = w2.at[:rep_dim, :rep_dim].set(eye)
    w2 = w2.at[rep_dim:rep_dim + ah, rep_dim:rep_dim + action_dim].set(params["actor_w2"])
    w2 = w2.at[rep_dim + ah:rep_dim + ah + ch, rep_dim + action_dim].set(params["critic_w2"][:, 0])
    w2 = w2.at[rep_dim + ah + ch:, rep_dim + action_dim + 1].set(params["aux_w2"][:, 0])
    b2 = jnp.zeros((1, out_width), jnp.float32)
    b2 = b2.at[:, rep_dim:rep_dim + action_dim].set(params["actor_b2"])
    b2 = b2.at[:, rep_dim + action_dim].set(params["critic_b2"][0, 0])
    b2 = b2.at[:, rep_dim + action_dim + 1].set(params["aux_b2"][0, 0])

    # Matmul operands in compute_dtype; biases stay f32 (f32 epilogue everywhere).
    return dict(
        wr=wr.astype(compute_dtype), br=br,
        w1=w1.astype(compute_dtype), b1=b1,
        w2=w2.astype(compute_dtype), b2=b2,
        rep_dim=rep_dim, action_dim=action_dim, out_width=out_width,
        compute_dtype=compute_dtype,
    )


def ppg_forward_packed(obs, packed, *, max_tile_b=4096, output_dtype=None):
    """obs: (B, obs_dim). Returns (state, logits, value, aux_value)."""
    B, obs_dim = obs.shape
    rep_dim = packed["rep_dim"]
    action_dim = packed["action_dim"]
    out_width = packed["out_width"]
    compute_dtype = packed["compute_dtype"]
    if output_dtype is None:
        # bf16 output slab on the bf16 path halves writeback bytes; f32 otherwise.
        output_dtype = compute_dtype
    output_dtype = jnp.dtype(output_dtype)

    # Batch tiling: cdiv-based so padding stays small; >= 2 grid steps for large
    # batches so the "parallel" batch axis shards across both TensorCores on v7x.
    sublane = 16 if compute_dtype == jnp.dtype(jnp.bfloat16) else 8
    num_tiles = max((B + max_tile_b - 1) // max_tile_b, 1)
    if B >= 1024:
        num_tiles = max(num_tiles, 2)
    tile_b = _round_up((B + num_tiles - 1) // num_tiles, sublane)
    b_pad = num_tiles * tile_b

    obs_p = obs.astype(compute_dtype)
    if b_pad != B:
        obs_p = jnp.pad(obs_p, ((0, b_pad - B), (0, 0)))

    wr, br, w1, b1, w2, b2 = (packed[k] for k in ("wr", "br", "w1", "b1", "w2", "b2"))
    wide = w1.shape[1]

    flops = 2 * b_pad * (obs_dim * wr.shape[1] + wr.shape[1] * wide + wide * out_width)
    bytes_accessed = (obs_p.size * obs_p.dtype.itemsize
                      + sum(int(a.size) * a.dtype.itemsize for a in (wr, br, w1, b1, w2, b2))
                      + b_pad * out_width * output_dtype.itemsize)

    def _const2d(i):
        return (0, 0)

    # NOTE: the six weight/bias inputs (<1 MB total) could be single-buffered via
    # pipeline_mode=pl.Buffered(1); left at the default for broad jax-version compat.
    in_specs = [
        pl.BlockSpec((tile_b, obs_dim), lambda i: (i, 0)),   # obs: tiled over batch
        pl.BlockSpec(wr.shape, _const2d),                    # packed weights: VMEM-resident
        pl.BlockSpec(br.shape, _const2d),
        pl.BlockSpec(w1.shape, _const2d),
        pl.BlockSpec(b1.shape, _const2d),
        pl.BlockSpec(w2.shape, _const2d),
        pl.BlockSpec(b2.shape, _const2d),
    ]
    out_spec = pl.BlockSpec((tile_b, out_width), lambda i: (i, 0))

    out = pl.pallas_call(
        _ppg_kernel,
        out_shape=jax.ShapeDtypeStruct((b_pad, out_width), output_dtype),
        grid=(num_tiles,),
        in_specs=in_specs,
        out_specs=out_spec,
        compiler_params=pltpu.CompilerParams(
            dimension_semantics=("parallel",),      # 2-TC sharding on v7x at large B
            vmem_limit_bytes=32 * 1024 * 1024,
        ),
        cost_estimate=pl.CostEstimate(
            flops=flops, transcendentals=0, bytes_accessed=bytes_accessed),
    )(obs_p, wr, br, w1, b1, w2, b2)

    out = out[:B]
    state = out[:, :rep_dim]
    logits = out[:, rep_dim:rep_dim + action_dim]
    value = out[:, rep_dim + action_dim]
    aux_value = out[:, rep_dim + action_dim + 1]
    # TODO(synk): the PyTorch forward wraps `logits` in a CategoricalDistribution object;
    # the kernel returns its logits parameterization (sampling/log_prob live off the hot path).
    return state, logits, value, aux_value


def ppg_actor_critic_forward(obs, params, *, compute_dtype=jnp.float32,
                             max_tile_b=4096, output_dtype=None):
    """Convenience wrapper: packs params then runs the fused kernel.

    For rollout loops, call pack_ppg_params() once per parameter update and use
    ppg_forward_packed() directly so the packing is not rebuilt every call.
    """
    packed = pack_ppg_params(params, compute_dtype)
    return ppg_forward_packed(obs, packed, max_tile_b=max_tile_b, output_dtype=output_dtype)


def _linear_init(key, fan_in, fan_out):
    """PyTorch-style Linear init: U(-1/sqrt(fan_in), 1/sqrt(fan_in)) for W and b."""
    kw, kb = jax.random.split(key)
    scale = 1.0 / jnp.sqrt(jnp.float32(fan_in))
    w = jax.random.uniform(kw, (fan_in, fan_out), jnp.float32, -scale, scale)
    b = jax.random.uniform(kb, (1, fan_out), jnp.float32, -scale, scale)
    return w, b


def _init_params(key, obs_dim, rep_dim, actor_hidden, critic_hidden, action_dim):
    """Deterministic synthetic init (mirrors the module's layer shapes)."""
    ks = jax.random.split(key, 7)
    rep_w, rep_b = _linear_init(ks[0], obs_dim, rep_dim)
    a_w1, a_b1 = _linear_init(ks[1], rep_dim, actor_hidden)
    a_w2, a_b2 = _linear_init(ks[2], actor_hidden, action_dim)
    c_w1, c_b1 = _linear_init(ks[3], rep_dim, critic_hidden)
    c_w2, c_b2 = _linear_init(ks[4], critic_hidden, 1)
    x_w1, x_b1 = _linear_init(ks[5], rep_dim, critic_hidden)
    x_w2, x_b2 = _linear_init(ks[6], critic_hidden, 1)
    return dict(
        rep_w=rep_w, rep_b=rep_b,
        actor_w1=a_w1, actor_b1=a_b1, actor_w2=a_w2, actor_b2=a_b2,
        critic_w1=c_w1, critic_b1=c_b1, critic_w2=c_w2, critic_b2=c_b2,
        aux_w1=x_w1, aux_b1=x_b1, aux_w2=x_w2, aux_b2=x_b2,
    )


def _reference_forward(obs, p):
    """Pure-JAX reference of the PyTorch forward semantics (supports diverged reps)."""
    relu = lambda v: jnp.maximum(v, 0.0)
    rep_a = relu(obs @ p["rep_w"] + p["rep_b"])
    rep_c = relu(obs @ p.get("critic_rep_w", p["rep_w"]) + p.get("critic_rep_b", p["rep_b"]))
    rep_x = relu(obs @ p.get("aux_rep_w", p["rep_w"]) + p.get("aux_rep_b", p["rep_b"]))
    logits = relu(rep_a @ p["actor_w1"] + p["actor_b1"]) @ p["actor_w2"] + p["actor_b2"]
    value = relu(rep_c @ p["critic_w1"] + p["critic_b1"]) @ p["critic_w2"] + p["critic_b2"]
    aux = relu(rep_x @ p["aux_w1"] + p["aux_b1"]) @ p["aux_w2"] + p["aux_b2"]
    return rep_a, logits, value[:, 0], aux[:, 0]


if __name__ == "__main__":
    key = jax.random.PRNGKey(0)
    k_obs, k_par = jax.random.split(key)

    B, obs_dim = 8, 32
    rep_dim, actor_hidden, critic_hidden, action_dim = 64, 64, 64, 6

    obs = jax.random.normal(k_obs, (B, obs_dim), jnp.float32)
    params = _init_params(k_par, obs_dim, rep_dim, actor_hidden, critic_hidden, action_dim)

    # Pack once; reuse across calls (hot-path caching).
    packed_f32 = pack_ppg_params(params, jnp.float32)

    # f32 path: match the pure-JAX reference tightly.
    state, logits, value, aux_value = jax.block_until_ready(
        ppg_forward_packed(obs, packed_f32))
    ref_state, ref_logits, ref_value, ref_aux = _reference_forward(obs, params)
    assert state.shape == (B, rep_dim)
    assert logits.shape == (B, action_dim)
    assert value.shape == (B,) and aux_value.shape == (B,)
    assert jnp.allclose(state, ref_state, atol=1e-4, rtol=1e-4)
    assert jnp.allclose(logits, ref_logits, atol=1e-4, rtol=1e-4)
    assert jnp.allclose(value, ref_value, atol=1e-4, rtol=1e-4)
    assert jnp.allclose(aux_value, ref_aux, atol=1e-4, rtol=1e-4)

    # Batch not a multiple of the sublane tile (exercises the padded-batch path).
    obs13 = jax.random.normal(jax.random.PRNGKey(1), (13, obs_dim), jnp.float32)
    s13, l13, v13, a13 = jax.block_until_ready(ppg_forward_packed(obs13, packed_f32))
    rs13, rl13, rv13, ra13 = _reference_forward(obs13, params)
    assert s13.shape == (13, rep_dim) and l13.shape == (13, action_dim)
    assert jnp.allclose(s13, rs13, atol=1e-4, rtol=1e-4)
    assert jnp.allclose(l13, rl13, atol=1e-4, rtol=1e-4)
    assert jnp.allclose(v13, rv13, atol=1e-4, rtol=1e-4)
    assert jnp.allclose(a13, ra13, atol=1e-4, rtol=1e-4)

    # Larger batch: exercises the multi-tile grid (>= 2 "parallel" steps, v7x 2-TC path).
    obs_big = jax.random.normal(jax.random.PRNGKey(2), (1050, obs_dim), jnp.float32)
    sbg, lbg, vbg, abg = jax.block_until_ready(ppg_forward_packed(obs_big, packed_f32))
    rsb, rlb, rvb, rab = _reference_forward(obs_big, params)
    assert jnp.allclose(sbg, rsb, atol=1e-4, rtol=1e-4)
    assert jnp.allclose(lbg, rlb, atol=1e-4, rtol=1e-4)
    assert jnp.allclose(vbg, rvb, atol=1e-4, rtol=1e-4)
    assert jnp.allclose(abg, rab, atol=1e-4, rtol=1e-4)

    # Diverged representation copies (as after PPG training): packed 3-branch path.
    kc, kx = jax.random.split(jax.random.PRNGKey(3))
    params_div = dict(params)
    params_div["critic_rep_w"], params_div["critic_rep_b"] = _linear_init(kc, obs_dim, rep_dim)
    params_div["aux_rep_w"], params_div["aux_rep_b"] = _linear_init(kx, obs_dim, rep_dim)
    packed_div = pack_ppg_params(params_div, jnp.float32)
    sd, ld, vd, ad = jax.block_until_ready(ppg_forward_packed(obs, packed_div))
    rsd, rld, rvd, rad = _reference_forward(obs, params_div)
    assert jnp.allclose(sd, rsd, atol=1e-4, rtol=1e-4)
    assert jnp.allclose(ld, rld, atol=1e-4, rtol=1e-4)
    assert jnp.allclose(vd, rvd, atol=1e-4, rtol=1e-4)
    assert jnp.allclose(ad, rad, atol=1e-4, rtol=1e-4)

    # bf16 path (bf16 obs DMA + bf16 operands + bf16 output slab); f32 MXU accumulation.
    packed_bf16 = pack_ppg_params(params, jnp.bfloat16)
    sb, lb, vb, ab = jax.block_until_ready(ppg_forward_packed(obs, packed_bf16))
    assert jnp.allclose(sb.astype(jnp.float32), ref_state, atol=5e-2, rtol=5e-2)
    assert jnp.allclose(lb.astype(jnp.float32), ref_logits, atol=5e-2, rtol=5e-2)
    assert jnp.allclose(vb.astype(jnp.float32), ref_value, atol=5e-2, rtol=5e-2)
    assert jnp.allclose(ab.astype(jnp.float32), ref_aux, atol=5e-2, rtol=5e-2)

    print("KERNEL_OK")
</pallas_src>

<mosaic_0001>
module attributes {stable_mosaic.version = 11 : i64} {
  func.func @_ppg_kernel(%arg0: i32, %arg1: memref<8x32xf32, #tpu.memory_space<vmem>>, %arg2: memref<32x192xf32, #tpu.memory_space<vmem>>, %arg3: memref<1x192xf32, #tpu.memory_space<vmem>>, %arg4: memref<192x256xf32, #tpu.memory_space<vmem>>, %arg5: memref<1x256xf32, #tpu.memory_space<vmem>>, %arg6: memref<256x128xf32, #tpu.memory_space<vmem>>, %arg7: memref<1x128xf32, #tpu.memory_space<vmem>>, %arg8: memref<8x128xf32, #tpu.memory_space<vmem>>) attributes {dimension_semantics = [#tpu.dimension_semantics<parallel>], iteration_bounds = array<i64: 1>, scalar_prefetch = 0 : i64, scratch_operands = 0 : i64, tpu.core_type = #tpu.core_type<tc>, window_params = [{transform_indices = @transform_0, window_bounds = array<i64: 8, 32>}, {pipeline_mode = #tpu.pipeline_mode<synchronous>, transform_indices = @transform_1, window_bounds = array<i64: 32, 192>}, {pipeline_mode = #tpu.pipeline_mode<synchronous>, transform_indices = @transform_2, window_bounds = array<i64: 1, 192>}, {pipeline_mode = #tpu.pipeline_mode<synchronous>, transform_indices = @transform_3, window_bounds = array<i64: 192, 256>}, {pipeline_mode = #tpu.pipeline_mode<synchronous>, transform_indices = @transform_4, window_bounds = array<i64: 1, 256>}, {pipeline_mode = #tpu.pipeline_mode<synchronous>, transform_indices = @transform_5, window_bounds = array<i64: 256, 128>}, {pipeline_mode = #tpu.pipeline_mode<synchronous>, transform_indices = @transform_6, window_bounds = array<i64: 1, 128>}, {transform_indices = @transform_7, window_bounds = array<i64: 8, 128>}]} {
    %c0 = arith.constant 0 : index
    %c0_0 = arith.constant 0 : index
    %0 = vector.load %arg1[%c0, %c0_0] : memref<8x32xf32, #tpu.memory_space<vmem>>, vector<8x32xf32>
    %c0_1 = arith.constant 0 : index
    %c0_2 = arith.constant 0 : index
    %1 = vector.load %arg2[%c0_1, %c0_2] : memref<32x192xf32, #tpu.memory_space<vmem>>, vector<32x192xf32>
    %cst = arith.constant dense<0.000000e+00> : vector<8x192xf32>
    %2 = tpu.matmul %0, %1, %cst {dimension_numbers = #tpu.dot_dimension_numbers<[1], [0], [0], [1], [0, 0, 1, 1], [], []>} : vector<8x32xf32>, vector<32x192xf32>, vector<8x192xf32> -> vector<8x192xf32>
    %c0_3 = arith.constant 0 : index
    %c0_4 = arith.constant 0 : index
    %3 = vector.load %arg3[%c0_3, %c0_4] : memref<1x192xf32, #tpu.memory_space<vmem>>, vector<1x192xf32>
    %4 = vector.broadcast %3 : vector<1x192xf32> to vector<8x192xf32>
    %5 = arith.addf %2, %4 : vector<8x192xf32>
    %cst_5 = arith.constant 0.000000e+00 : f32
    %6 = vector.broadcast %cst_5 : f32 to vector<8x192xf32>
    %7 = arith.maximumf %5, %6 : vector<8x192xf32>
    %c0_6 = arith.constant 0 : index
    %c0_7 = arith.constant 0 : index
    %8 = vector.load %arg4[%c0_6, %c0_7] : memref<192x256xf32, #tpu.memory_space<vmem>>, vector<192x256xf32>
    %cst_8 = arith.constant dense<0.000000e+00> : vector<8x256xf32>
    %9 = tpu.matmul %7, %8, %cst_8 {dimension_numbers = #tpu.dot_dimension_numbers<[1], [0], [0], [1], [0, 0, 1, 1], [], []>} : vector<8x192xf32>, vector<192x256xf32>, vector<8x256xf32> -> vector<8x256xf32>
    %c0_9 = arith.constant 0 : index
    %c0_10 = arith.constant 0 : index
    %10 = vector.load %arg5[%c0_9, %c0_10] : memref<1x256xf32, #tpu.memory_space<vmem>>, vector<1x256xf32>
    %11 = vector.broadcast %10 : vector<1x256xf32> to vector<8x256xf32>
    %12 = arith.addf %9, %11 : vector<8x256xf32>
    %cst_11 = arith.constant 0.000000e+00 : f32
    %13 = vector.broadcast %cst_11 : f32 to vector<8x256xf32>
    %14 = arith.maximumf %12, %13 : vector<8x256xf32>
    %c0_12 = arith.constant 0 : index
    %c0_13 = arith.constant 0 : index
    %15 = vector.load %arg6[%c0_12, %c0_13] : memref<256x128xf32, #tpu.memory_space<vmem>>, vector<256x128xf32>
    %cst_14 = arith.constant dense<0.000000e+00> : vector<8x128xf32>
    %16 = tpu.matmul %14, %15, %cst_14 {dimension_numbers = #tpu.dot_dimension_numbers<[1], [0], [0], [1], [0, 0, 1, 1], [], []>} : vector<8x256xf32>, vector<256x128xf32>, vector<8x128xf32> -> vector<8x128xf32>
    %c0_15 = arith.constant 0 : index
    %c0_16 = arith.constant 0 : index
    %17 = vector.load %arg7[%c0_15, %c0_16] : memref<1x128xf32, #tpu.memory_space<vmem>>, vector<1x128xf32>
    %18 = vector.broadcast %17 : vector<1x128xf32> to vector<8x128xf32>
    %19 = arith.addf %16, %18 : vector<8x128xf32>
    %c0_17 = arith.constant 0 : index
    %c0_18 = arith.constant 0 : index
    %20 = vector.load %arg8[%c0_17, %c0_18] : memref<8x128xf32, #tpu.memory_space<vmem>>, vector<8x128xf32>
    tpu.vector_store %arg8[%c0_17, %c0_18], %19 {strides = array<i32>} : memref<8x128xf32, #tpu.memory_space<vmem>>, vector<8x128xf32>,
    return
  }
  func.func @transform_0(%arg0: i32) -> (i32, i32) {
    %c0_i32 = arith.constant 0 : i32
    %c0_i32_0 = arith.constant 0 : i32
    return %arg0, %c0_i32 : i32, i32
  }
  func.func @transform_1(%arg0: i32) -> (i32, i32) {
    %c0_i32 = arith.constant 0 : i32
    %c0_i32_0 = arith.constant 0 : i32
    %c0_i32_1 = arith.constant 0 : i32
    return %c0_i32, %c0_i32_0 : i32, i32
  }
  func.func @transform_2(%arg0: i32) -> (i32, i32) {
    %c0_i32 = arith.constant 0 : i32
    %c0_i32_0 = arith.constant 0 : i32
    %c0_i32_1 = arith.constant 0 : i32
    return %c0_i32, %c0_i32_0 : i32, i32
  }
  func.func @transform_3(%arg0: i32) -> (i32, i32) {
    %c0_i32 = arith.constant 0 : i32
    %c0_i32_0 = arith.constant 0 : i32
    %c0_i32_1 = arith.constant 0 : i32
    return %c0_i32, %c0_i32_0 : i32, i32
  }
  func.func @transform_4(%arg0: i32) -> (i32, i32) {
    %c0_i32 = arith.constant 0 : i32
    %c0_i32_0 = arith.constant 0 : i32
    %c0_i32_1 = arith.constant 0 : i32
    return %c0_i32, %c0_i32_0 : i32, i32
  }
  func.func @transform_5(%arg0: i32) -> (i32, i32) {
    %c0_i32 = arith.constant 0 : i32
    %c0_i32_0 = arith.constant 0 : i32
    %c0_i32_1 = arith.constant 0 : i32
    return %c0_i32, %c0_i32_0 : i32, i32
  }
  func.func @transform_6(%arg0: i32) -> (i32, i32) {
    %c0_i32 = arith.constant 0 : i32
    %c0_i32_0 = arith.constant 0 : i32
    %c0_i32_1 = arith.constant 0 : i32
    return %c0_i32, %c0_i32_0 : i32, i32
  }
  func.func @transform_7(%arg0: i32) -> (i32, i32) {
    %c0_i32 = arith.constant 0 : i32
    %c0_i32_0 = arith.constant 0 : i32
    return %arg0, %c0_i32 : i32, i32
  }
}

</mosaic_0001>

<llo_original>
// kernel: tpu_custom_call.1
$region0: #{tpu_custom_call.1}
  #allocation0 [shape = 'u32[]', space=smem, size = 0x4, offset = 0x4, fixed_abs, tag = 'smem constant byte address 0x4 - core index']
  #allocation1 [shape = 'u32[144,128]{1,0:T(1,128)}', space=vmem, size = 0x12000, scoped, tag = 'internal scratch']
  %s0 = inlined_call_operand.hbm [shape: f32[8,32], index: 0, kind: input, shape index: {}]
  %s1 = inlined_call_operand.hbm [shape: f32[32,192], index: 1, kind: input, shape index: {}]
  %s2 = inlined_call_operand.vmem [shape: f32[1,192], index: 2, kind: input, shape index: {}]
  %s3 = inlined_call_operand.hbm [shape: f32[192,256], index: 3, kind: input, shape index: {}]
  %s4 = inlined_call_operand.vmem [shape: f32[1,256], index: 4, kind: input, shape index: {}]
  %s5 = inlined_call_operand.hbm [shape: f32[256,128], index: 5, kind: input, shape index: {}]
  %s6 = inlined_call_operand.vmem [shape: f32[1,128], index: 6, kind: input, shape index: {}]
  %s7 = inlined_call_operand.hbm [shape: f32[8,128], index: 7, kind: output, shape index: {}]
  %s8 = sld [smem:[#allocation0]]
  $region54: #{tpu_custom_call.1} parent=0
    _
  %s10 = ssub.s32 1, %s8
  %s11 = scalar_select 0, %s10, %s8
  $region1: #{tpu_custom_call.1} parent=0
    #allocation2 [shape = 'u8[4096]{0}', space=vmem, size = 0x1000, scoped, tag = 'input window, operand 0, single buffered']
    #allocation3 [shape = 's32[1]{0}', space=sflag, size = 0x4, scoped, tag = 'scoped memory for tpu_custom_call.1']
    #allocation4 [shape = 's32[1]{0}', space=sflag, size = 0x4, scoped, tag = 'scoped memory for tpu_custom_call.1']
    #allocation5 [shape = 'u8[32768]{0}', space=vmem, size = 0x8000, scoped, tag = 'input window, operand 1, single buffered']
    #allocation6 [shape = 's32[1]{0}', space=sflag, size = 0x4, scoped, tag = 'scoped memory for tpu_custom_call.1']
    #allocation7 [shape = 'u8[196608]{0}', space=vmem, size = 0x30000, scoped, tag = 'input window, operand 3, single buffered']
    #allocation8 [shape = 'u8[131072]{0}', space=vmem, size = 0x20000, scoped, tag = 'input window, operand 5, single buffered']
    #allocation9 [shape = 's32[1]{0}', space=sflag, size = 0x4, scoped, tag = 'scoped memory for tpu_custom_call.1']
    #allocation10 [shape = 'u8[4096]{0}', space=vmem, size = 0x1000, scoped, tag = 'output window, operand 0, single buffered']
    %12 = vsyncpa [#allocation3], 0
    %13 = vsyncpa [#allocation6], 0
    %14 = vsyncpa [#allocation9], 0
    %15 = vsyncpa [#allocation4], 0
    // Predicated region
    $region2: #{tpu_custom_call.1} parent=1 // pred_check
      _
    $region3: #{tpu_custom_call.1} parent=1 // pred_check_branch
      %17 = sbr.rel (0) target = $region5
    $region4: #{tpu_custom_call.1} parent=1 // pred_region
      %s19 = ssub.s32 128, 128
      %20 = vsyncadd [#allocation3], %s19
      %s22 = sshll.u32 [#allocation2], 4
      %s23 = int_to_ptr.vmem [resolvable:$true] %s22
      %25 = dma.hbm_to_vmem [thread:$0]  %s0, 128, %s23, [#allocation3]
    $region5: #{tpu_custom_call.1} parent=1 // pred_fallthru
      _
    // Predicated region
    $region6: #{tpu_custom_call.1} parent=1 // pred_check
      _
    $region7: #{tpu_custom_call.1} parent=1 // pred_check_branch
      %27 = sbr.rel (0) target = $region9
    $region8: #{tpu_custom_call.1} parent=1 // pred_region
      %s29 = ssub.s32 1024, 1024
      %30 = vsyncadd [#allocation6], %s29
      %s31 = sshll.u32 [#allocation5], 4
      %s32 = int_to_ptr.vmem [resolvable:$true] %s31
      %37 = dma.hbm_to_vmem [thread:$0]  %s1, 1024, %s32, [#allocation6], 256, 256, 16
    $region9: #{tpu_custom_call.1} parent=1 // pred_fallthru
      _
    // Predicated region
    $region10: #{tpu_custom_call.1} parent=1 // pred_check
      _
    $region11: #{tpu_custom_call.1} parent=1 // pred_check_branch
      %39 = sbr.rel (0) target = $region13
    $region12: #{tpu_custom_call.1} parent=1 // pred_region
      _
    $region13: #{tpu_custom_call.1} parent=1 // pred_fallthru
      _
    // Predicated region
    $region14: #{tpu_custom_call.1} parent=1 // pred_check
      _
    $region15: #{tpu_custom_call.1} parent=1 // pred_check_branch
      %41 = sbr.rel (0) target = $region17
    $region16: #{tpu_custom_call.1} parent=1 // pred_region
      %s43 = ssub.s32 6144, 6144
      %44 = vsyncadd [#allocation6], %s43
      %s45 = sshll.u32 [#allocation7], 4
      %s46 = int_to_ptr.vmem [resolvable:$true] %s45
      %51 = dma.hbm_to_vmem [thread:$0]  %s3, 6144, %s46, [#allocation6], 256, 256, 16
    $region17: #{tpu_custom_call.1} parent=1 // pred_fallthru
      _
    // Predicated region
    $region18: #{tpu_custom_call.1} parent=1 // pred_check
      _
    $region19: #{tpu_custom_call.1} parent=1 // pred_check_branch
      %53 = sbr.rel (0) target = $region21
    $region20: #{tpu_custom_call.1} parent=1 // pred_region
      _
    $region21: #{tpu_custom_call.1} parent=1 // pred_fallthru
      _
    // Predicated region
    $region22: #{tpu_custom_call.1} parent=1 // pred_check
      _
    $region23: #{tpu_custom_call.1} parent=1 // pred_check_branch
      %55 = sbr.rel (0) target = $region25
    $region24: #{tpu_custom_call.1} parent=1 // pred_region
      %s57 = ssub.s32 4096, 4096
      %58 = vsyncadd [#allocation9], %s57
      %s59 = sshll.u32 [#allocation8], 4
      %s60 = int_to_ptr.vmem [resolvable:$true] %s59
      %65 = dma.hbm_to_vmem [thread:$0]  %s5, 4096, %s60, [#allocation9], 128, 128, 8
    $region25: #{tpu_custom_call.1} parent=1 // pred_fallthru
      _
    // Predicated region
    $region26: #{tpu_custom_call.1} parent=1 // pred_check
      _
    $region27: #{tpu_custom_call.1} parent=1 // pred_check_branch
      %67 = sbr.rel (0) target = $region29
    $region28: #{tpu_custom_call.1} parent=1 // pred_region
      _
    $region29: #{tpu_custom_call.1} parent=1 // pred_fallthru
      _
    // Predicated region
    $region30: #{tpu_custom_call.1} parent=1 // pred_check
      _
    $region31: #{tpu_custom_call.1} parent=1 // pred_check_branch
      %69 = sbr.rel (0) target = $region33
    $region32: #{tpu_custom_call.1} parent=1 // pred_region
      %70 = dma.done [#allocation3], 128
    $region33: #{tpu_custom_call.1} parent=1 // pred_fallthru
      _
    // Predicated region
    $region34: #{tpu_custom_call.1} parent=1 // pred_check
      _
    $region35: #{tpu_custom_call.1} parent=1 // pred_check_branch
      %72 = sbr.rel (0) target = $region37
    $region36: #{tpu_custom_call.1} parent=1 // pred_region
      %73 = dma.done [#allocation6], 1024
    $region37: #{tpu_custom_call.1} parent=1 // pred_fallthru
      _
    // Predicated region
    $region38: #{tpu_custom_call.1} parent=1 // pred_check
      _
    $region39: #{tpu_custom_call.1} parent=1 // pred_check_branch
      %75 = sbr.rel (0) target = $region41
    $region40: #{tpu_custom_call.1} parent=1 // pred_region
      %76 = dma.done [#allocation6], 6144
    $region41: #{tpu_custom_call.1} parent=1 // pred_fallthru
      _
    // Predicated region
    $region42: #{tpu_custom_call.1} parent=1 // pred_check
      _
    $region43: #{tpu_custom_call.1} parent=1 // pred_check_branch
      %78 = sbr.rel (0) target = $region45
    $region44: #{tpu_custom_call.1} parent=1 // pred_region
      %79 = dma.done [#allocation9], 4096
    $region45: #{tpu_custom_call.1} parent=1 // pred_fallthru
      _
    %v80 = vld [vmem:[#allocation2] sm:$0xff]
    %v81 = vld [vmem:[#allocation5] sm:$0xff]
    %v82 = vld [vmem:[#allocation5 + $0x8] sm:$0xff]
    %v83 = vld [vmem:[#allocation5 + $0x10] sm:$0xff]
    %v84 = vld [vmem:[#allocation5 + $0x18] sm:$0xff]
    %v85 = vld [vmem:[#allocation5 + $0x20] sm:$0xff]
    %v86 = vld [vmem:[#allocation5 + $0x28] sm:$0xff]
    %v87 = vld [vmem:[#allocation5 + $0x30] sm:$0xff]
    %v88 = vld [vmem:[#allocation5 + $0x38] sm:$0xff]
    %v89 = vld [vmem:[%s2] sm:$0x3]
    %v91 = vlaneseq
    %v92 = vshrl.u32 %v91, 7
    %v93 = vsub.s32 0, %v92
    %v94 = vrot.slane %v89, %v93
    %v95 = vlaneseq
    %v96 = vshrl.u32 %v95, 7
    %v97 = vsub.s32 1, %v96
    %v98 = vrot.slane %v89, %v97
    %vm101 = vcmask 261120
    %v103 = vsel %vm101, %v80, 0
    %105 = vmatprep.subr.mxu0 %v82
    %106 = vmatpush1.msra.mxu0 %v81
    %107 = vmatprep.subr.mxu0 %v84
    %108 = vmatpush1.msra.mxu0 %v83
    %109 = vmatprep.subr.mxu0 %v86
    %110 = vmatpush1.msra.mxu0 %v85
    %111 = vmatprep.subr.mxu0 %v88
    %112 = vmatpush1.msra.mxu0 %v87
    %113 = vmatprep.subr.mxu0 0.0
    %114 = vmatpush1.msra.mxu0 0.0
    %115 = vmatprep.subr.mxu0 0.0
    %116 = vmatpush1.msra.mxu0 0.0
    %117 = vmatprep.subr.mxu0 0.0
    %118 = vmatpush1.msra.mxu0 0.0
    %119 = vmatprep.subr.mxu0 0.0
    %120 = vmatpush1.msra.mxu0 0.0
    %121 = vmatprep.subr.mxu0 0.0
    %122 = vmatpush1.msra.mxu0 0.0
    %123 = vmatprep.subr.mxu0 0.0
    %124 = vmatpush1.msra.mxu0 0.0
    %125 = vmatprep.subr.mxu0 0.0
    %126 = vmatpush1.msra.mxu0 0.0
    %127 = vmatprep.subr.mxu0 0.0
    %128 = vmatpush1.msra.mxu0 0.0
    %129 = vmatprep.subr.mxu0 0.0
    %130 = vmatpush1.msra.mxu0 0.0
    %131 = vmatprep.subr.mxu0 0.0
    %132 = vmatpush1.msra.mxu0 0.0
    %133 = vmatprep.subr.mxu0 0.0
    %134 = vmatpush1.msra.mxu0 0.0
    %135 = vmatprep.subr.mxu0 0.0
    %136 = vmatpush1.msra.mxu0 0.0
    %137 = vmatprep.subr.mxu0 0.0
    %138 = vmatpush1.msra.mxu0 0.0
    %139 = vmatprep.subr.mxu0 0.0
    %140 = vmatpush1.msra.mxu0 0.0
    %141 = vmatprep.subr.mxu0 0.0
    %142 = vmatpush1.msra.mxu0 0.0
    %143 = vmatprep.subr.mxu0 0.0
    %144 = vmatpush1.msra.mxu0 0.0
    %145 = vmatprep.subr.mxu0 0.0
    %146 = vmatpush1.msra.mxu0 0.0
    %147 = vmatprep.subr.mxu0 0.0
    %148 = vmatpush1.msra.mxu0 0.0
    %149 = vmatprep.subr.mxu0 0.0
    %150 = vmatpush1.msra.mxu0 0.0
    %151 = vmatprep.subr.mxu0 0.0
    %152 = vmatpush1.msra.mxu0 0.0
    %153 = vmatprep.subr.mxu0 0.0
    %154 = vmatpush1.msra.mxu0 0.0
    %155 = vmatprep.subr.mxu0 0.0
    %156 = vmatpush1.msra.mxu0 0.0
    %157 = vmatprep.subr.mxu0 0.0
    %158 = vmatpush1.msra.mxu0 0.0
    %159 = vmatprep.subr.mxu0 0.0
    %160 = vmatpush1.msra.mxu0 0.0
    %161 = vmatprep.subr.mxu0 0.0
    %162 = vmatpush1.msra.mxu0 0.0
    %163 = vmatprep.subr.mxu0 0.0
    %164 = vmatpush1.msra.mxu0 0.0
    %165 = vmatprep.subr.mxu0 0.0
    %166 = vmatpush1.msra.mxu0 0.0
    %167 = vmatprep.subr.mxu0 0.0
    %168 = vmatpush1.msra.mxu0 0.0
    %169 = vmatprep.mubr.f32.mxu0 0.0
    %170 = vmatmul.mubr.f32.gmra.mrb[0].mxu0 %v103
    %v171 = vpop.f32.mrb[0].mxu0
    %v172 = vadd.f32 %v94, %v171
    %v173 = vpop.f32.mrb[0].mxu0
    %v174 = vadd.f32 %v98, %v173
    %175 = vdwg.mxu0
    %v176 = vmax.f32 %v172, 0.0
    %v177 = vmax.f32 %v174, 0.0
    %v178 = vld [vmem:[#allocation7] sm:$0xff]
    %v179 = vld [vmem:[#allocation7 + $0x8] sm:$0xff]
    %v180 = vld [vmem:[#allocation7 + $0x10] sm:$0xff]
    %v181 = vld [vmem:[#allocation7 + $0x18] sm:$0xff]
    %v182 = vld [vmem:[#allocation7 + $0x20] sm:$0xff]
    %v183 = vld [vmem:[#allocation7 + $0x28] sm:$0xff]
    %v184 = vld [vmem:[#allocation7 + $0x30] sm:$0xff]
    %v185 = vld [vmem:[#allocation7 + $0x38] sm:$0xff]
    %v186 = vld [vmem:[#allocation7 + $0x40] sm:$0xff]
    %v187 = vld [vmem:[#allocation7 + $0x48] sm:$0xff]
    %v188 = vld [vmem:[#allocation7 + $0x50] sm:$0xff]
    %v189 = vld [vmem:[#allocation7 + $0x58] sm:$0xff]
    %v190 = vld [vmem:[#allocation7 + $0x60] sm:$0xff]
    %v191 = vld [vmem:[#allocation7 + $0x68] sm:$0xff]
    %v192 = vld [vmem:[#allocation7 + $0x70] sm:$0xff]
    %v193 = vld [vmem:[#allocation7 + $0x78] sm:$0xff]
    %v194 = vld [vmem:[#allocation7 + $0x80] sm:$0xff]
    %v195 = vld [vmem:[#allocation7 + $0x88] sm:$0xff]
    %v196 = vld [vmem:[#allocation7 + $0x90] sm:$0xff]
    %v197 = vld [vmem:[#allocation7 + $0x98] sm:$0xff]
    %v198 = vld [vmem:[#allocation7 + $0xa0] sm:$0xff]
    %v199 = vld [vmem:[#allocation7 + $0xa8] sm:$0xff]
    %v200 = vld [vmem:[#allocation7 + $0xb0] sm:$0xff]
    %v201 = vld [vmem:[#allocation7 + $0xb8] sm:$0xff]
    %v202 = vld [vmem:[#allocation7 + $0xc0] sm:$0xff]
    %v203 = vld [vmem:[#allocation7 + $0xc8] sm:$0xff]
    %v204 = vld [vmem:[#allocation7 + $0xd0] sm:$0xff]
    %v205 = vld [vmem:[#allocation7 + $0xd8] sm:$0xff]
    %v206 = vld [vmem:[#allocation7 + $0xe0] sm:$0xff]
    %v207 = vld [vmem:[#allocation7 + $0xe8] sm:$0xff]
    %v208 = vld [vmem:[#allocation7 + $0xf0] sm:$0xff]
    %v209 = vld [vmem:[#allocation7 + $0xf8] sm:$0xff]
    %v210 = vld [vmem:[#allocation7 + $0x100] sm:$0xff]
    %v211 = vld [vmem:[#allocation7 + $0x108] sm:$0xff]
    %v212 = vld [vmem:[#allocation7 + $0x110] sm:$0xff]
    %v213 = vld [vmem:[#allocation7 + $0x118] sm:$0xff]
    %v214 = vld [vmem:[#allocation7 + $0x120] sm:$0xff]
    %v215 = vld [vmem:[#allocation7 + $0x128] sm:$0xff]
    %v216 = vld [vmem:[#allocation7 + $0x130] sm:$0xff]
    %v217 = vld [vmem:[#allocation7 + $0x138] sm:$0xff]
    %v218 = vld [vmem:[#allocation7 + $0x140] sm:$0xff]
    %v219 = vld [vmem:[#allocation7 + $0x148] sm:$0xff]
    %v220 = vld [vmem:[#allocation7 + $0x150] sm:$0xff]
    %v221 = vld [vmem:[#allocation7 + $0x158] sm:$0xff]
    %v222 = vld [vmem:[#allocation7 + $0x160] sm:$0xff]
    %v223 = vld [vmem:[#allocation7 + $0x168] sm:$0xff]
    %v224 = vld [vmem:[#allocation7 + $0x170] sm:$0xff]
    %v225 = vld [vmem:[#allocation7 + $0x178] sm:$0xff]
    %v226 = vld [vmem:[%s4] sm:$0x3]
    %v228 = vlaneseq
    %v229 = vshrl.u32 %v228, 7
    %v230 = vsub.s32 0, %v229
    %v231 = vrot.slane %v226, %v230
    %v232 = vlaneseq
    %v233 = vshrl.u32 %v232, 7
    %v234 = vsub.s32 1, %v233
    %v235 = vrot.slane %v226, %v234
    %vm238 = vcmask 523264
    %v240 = vsel %vm238, %v177, 0
    %242 = vmatprep.subr.mxu0 %v179
    %243 = vmatpush1.msra.mxu0 %v178
    %244 = vmatprep.subr.mxu0 %v181
    %245 = vmatpush1.msra.mxu0 %v180
    %246 = vmatprep.subr.mxu0 %v183
    %247 = vmatpush1.msra.mxu0 %v182
    %248 = vmatprep.subr.mxu0 %v185
    %249 = vmatpush1.msra.mxu0 %v184
    %250 = vmatprep.subr.mxu0 %v187
    %251 = vmatpush1.msra.mxu0 %v186
    %252 = vmatprep.subr.mxu0 %v189
    %253 = vmatpush1.msra.mxu0 %v188
    %254 = vmatprep.subr.mxu0 %v191
    %255 = vmatpush1.msra.mxu0 %v190
    %256 = vmatprep.subr.mxu0 %v193
    %257 = vmatpush1.msra.mxu0 %v192
    %258 = vmatprep.subr.mxu0 %v195
    %259 = vmatpush1.msra.mxu0 %v194
    %260 = vmatprep.subr.mxu0 %v197
    %261 = vmatpush1.msra.mxu0 %v196
    %262 = vmatprep.subr.mxu0 %v199
    %263 = vmatpush1.msra.mxu0 %v198
    %264 = vmatprep.subr.mxu0 %v201
    %265 = vmatpush1.msra.mxu0 %v200
    %266 = vmatprep.subr.mxu0 %v203
    %267 = vmatpush1.msra.mxu0 %v202
    %268 = vmatprep.subr.mxu0 %v205
    %269 = vmatpush1.msra.mxu0 %v204
    %270 = vmatprep.subr.mxu0 %v207
    %271 = vmatpush1.msra.mxu0 %v206
    %272 = vmatprep.subr.mxu0 %v209
    %273 = vmatpush1.msra.mxu0 %v208
    %274 = vmatprep.subr.mxu0 %v211
    %275 = vmatpush1.msra.mxu0 %v210
    %276 = vmatprep.subr.mxu0 %v213
    %277 = vmatpush1.msra.mxu0 %v212
    %278 = vmatprep.subr.mxu0 %v215
    %279 = vmatpush1.msra.mxu0 %v214
    %280 = vmatprep.subr.mxu0 %v217
    %281 = vmatpush1.msra.mxu0 %v216
    %282 = vmatprep.subr.mxu0 %v219
    %283 = vmatpush1.msra.mxu0 %v218
    %284 = vmatprep.subr.mxu0 %v221
    %285 = vmatpush1.msra.mxu0 %v220
    %286 = vmatprep.subr.mxu0 %v223
    %287 = vmatpush1.msra.mxu0 %v222
    %288 = vmatprep.subr.mxu0 %v225
    %289 = vmatpush1.msra.mxu0 %v224
    %290 = vmatprep.subr.mxu0 0.0
    %291 = vmatpush1.msra.mxu0 0.0
    %292 = vmatprep.subr.mxu0 0.0
    %293 = vmatpush1.msra.mxu0 0.0
    %294 = vmatprep.subr.mxu0 0.0
    %295 = vmatpush1.msra.mxu0 0.0
    %296 = vmatprep.subr.mxu0 0.0
    %297 = vmatpush1.msra.mxu0 0.0
    %298 = vmatprep.subr.mxu0 0.0
    %299 = vmatpush1.msra.mxu0 0.0
    %300 = vmatprep.subr.mxu0 0.0
    %301 = vmatpush1.msra.mxu0 0.0
    %302 = vmatprep.subr.mxu0 0.0
    %303 = vmatpush1.msra.mxu0 0.0
    %304 = vmatprep.subr.mxu0 0.0
    %305 = vmatpush1.msra.mxu0 0.0
    %306 = vmatprep.mubr.f32.mxu0 %v240
    %307 = vmatmul.mubr.f32.gmra.mrb[0].mxu0 %v176
    %v308 = vpop.f32.mrb[0].mxu0
    %v309 = vadd.f32 %v231, %v308
    %v310 = vpop.f32.mrb[0].mxu0
    %v311 = vadd.f32 %v235, %v310
    %312 = vdwg.mxu0
    %v313 = vmax.f32 %v309, 0.0
    %v314 = vmax.f32 %v311, 0.0
    %v315 = vld [vmem:[#allocation8] sm:$0xff]
    %v316 = vld [vmem:[#allocation8 + $0x8] sm:$0xff]
    %v317 = vld [vmem:[#allocation8 + $0x10] sm:$0xff]
    %v318 = vld [vmem:[#allocation8 + $0x18] sm:$0xff]
    %v319 = vld [vmem:[#allocation8 + $0x20] sm:$0xff]
    %v320 = vld [vmem:[#allocation8 + $0x28] sm:$0xff]
    %v321 = vld [vmem:[#allocation8 + $0x30] sm:$0xff]
    %v322 = vld [vmem:[#allocation8 + $0x38] sm:$0xff]
    %v323 = vld [vmem:[#allocation8 + $0x40] sm:$0xff]
    %v324 = vld [vmem:[#allocation8 + $0x48] sm:$0xff]
    %v325 = vld [vmem:[#allocation8 + $0x50] sm:$0xff]
    %v326 = vld [vmem:[#allocation8 + $0x58] sm:$0xff]
    %v327 = vld [vmem:[#allocation8 + $0x60] sm:$0xff]
    %v328 = vld [vmem:[#allocation8 + $0x68] sm:$0xff]
    %v329 = vld [vmem:[#allocation8 + $0x70] sm:$0xff]
    %v330 = vld [vmem:[#allocation8 + $0x78] sm:$0xff]
    %v331 = vld [vmem:[#allocation8 + $0x80] sm:$0xff]
    %v332 = vld [vmem:[#allocation8 + $0x88] sm:$0xff]
    %v333 = vld [vmem:[#allocation8 + $0x90] sm:$0xff]
    %v334 = vld [vmem:[#allocation8 + $0x98] sm:$0xff]
    %v335 = vld [vmem:[#allocation8 + $0xa0] sm:$0xff]
    %v336 = vld [vmem:[#allocation8 + $0xa8] sm:$0xff]
    %v337 = vld [vmem:[#allocation8 + $0xb0] sm:$0xff]
    %v338 = vld [vmem:[#allocation8 + $0xb8] sm:$0xff]
    %v339 = vld [vmem:[#allocation8 + $0xc0] sm:$0xff]
    %v340 = vld [vmem:[#allocation8 + $0xc8] sm:$0xff]
    %v341 = vld [vmem:[#allocation8 + $0xd0] sm:$0xff]
    %v342 = vld [vmem:[#allocation8 + $0xd8] sm:$0xff]
    %v343 = vld [vmem:[#allocation8 + $0xe0] sm:$0xff]
    %v344 = vld [vmem:[#allocation8 + $0xe8] sm:$0xff]
    %v345 = vld [vmem:[#allocation8 + $0xf0] sm:$0xff]
    %v346 = vld [vmem:[#allocation8 + $0xf8] sm:$0xff]
    %v347 = vld [vmem:[%s6] sm:$0x1]
    %v349 = vlaneseq
    %v350 = vshrl.u32 %v349, 7
    %v351 = vsub.s32 0, %v350
    %v352 = vrot.slane %v347, %v351
    %354 = vmatprep.subr.mxu0 0.0
    %355 = vmatpush1.msra.mxu0 %v315
    %356 = vmatprep.subr.mxu0 0.0
    %357 = vmatpush1.msra.mxu0 %v316
    %358 = vmatprep.subr.mxu0 0.0
    %359 = vmatpush1.msra.mxu0 %v317
    %360 = vmatprep.subr.mxu0 0.0
    %361 = vmatpush1.msra.mxu0 %v318
    %362 = vmatprep.subr.mxu0 0.0
    %363 = vmatpush1.msra.mxu0 %v319
    %364 = vmatprep.subr.mxu0 0.0
    %365 = vmatpush1.msra.mxu0 %v320
    %366 = vmatprep.subr.mxu0 0.0
    %367 = vmatpush1.msra.mxu0 %v321
    %368 = vmatprep.subr.mxu0 0.0
    %369 = vmatpush1.msra.mxu0 %v322
    %370 = vmatprep.subr.mxu0 0.0
    %371 = vmatpush1.msra.mxu0 %v323
    %372 = vmatprep.subr.mxu0 0.0
    %373 = vmatpush1.msra.mxu0 %v324
    %374 = vmatprep.subr.mxu0 0.0
    %375 = vmatpush1.msra.mxu0 %v325
    %376 = vmatprep.subr.mxu0 0.0
    %377 = vmatpush1.msra.mxu0 %v326
    %378 = vmatprep.subr.mxu0 0.0
    %379 = vmatpush1.msra.mxu0 %v327
    %380 = vmatprep.subr.mxu0 0.0
    %381 = vmatpush1.msra.mxu0 %v328
    %382 = vmatprep.subr.mxu0 0.0
    %383 = vmatpush1.msra.mxu0 %v329
    %384 = vmatprep.subr.mxu0 0.0
    %385 = vmatpush1.msra.mxu0 %v330
    %386 = vmatprep.subr.mxu0 0.0
    %387 = vmatpush1.msra.mxu0 %v331
    %388 = vmatprep.subr.mxu0 0.0
    %389 = vmatpush1.msra.mxu0 %v332
    %390 = vmatprep.subr.mxu0 0.0
    %391 = vmatpush1.msra.mxu0 %v333
    %392 = vmatprep.subr.mxu0 0.0
    %393 = vmatpush1.msra.mxu0 %v334
    %394 = vmatprep.subr.mxu0 0.0
    %395 = vmatpush1.msra.mxu0 %v335
    %396 = vmatprep.subr.mxu0 0.0
    %397 = vmatpush1.msra.mxu0 %v336
    %398 = vmatprep.subr.mxu0 0.0
    %399 = vmatpush1.msra.mxu0 %v337
    %400 = vmatprep.subr.mxu0 0.0
    %401 = vmatpush1.msra.mxu0 %v338
    %402 = vmatprep.subr.mxu0 0.0
    %403 = vmatpush1.msra.mxu0 %v339
    %404 = vmatprep.subr.mxu0 0.0
    %405 = vmatpush1.msra.mxu0 %v340
    %406 = vmatprep.subr.mxu0 0.0
    %407 = vmatpush1.msra.mxu0 %v341
    %408 = vmatprep.subr.mxu0 0.0
    %409 = vmatpush1.msra.mxu0 %v342
    %410 = vmatprep.subr.mxu0 0.0
    %411 = vmatpush1.msra.mxu0 %v343
    %412 = vmatprep.subr.mxu0 0.0
    %413 = vmatpush1.msra.mxu0 %v344
    %414 = vmatprep.subr.mxu0 0.0
    %415 = vmatpush1.msra.mxu0 %v345
    %416 = vmatprep.subr.mxu0 0.0
    %417 = vmatpush1.msra.mxu0 %v346
    %418 = vmatprep.mubr.f32.mxu0 %v314
    %419 = vmatmul.mubr.f32.gmra.mrb[0].mxu0 %v313
    %v420 = vpop.f32.mrb[0].mxu0
    %v421 = vadd.f32 %v352, %v420
    %v422 = vpop.f32.mrb[0].mxu0
    %423 = vdwg.mxu0
    %424 = vst [vmem:[#allocation10] sm:$0xff] %v421
    // Predicated region
    $region46: #{tpu_custom_call.1} parent=1 // pred_check
      _
    $region47: #{tpu_custom_call.1} parent=1 // pred_check_branch
      %426 = sbr.rel (0) target = $region49
    $region48: #{tpu_custom_call.1} parent=1 // pred_region
      %s428 = ssub.s32 128, 128
      %429 = vsyncadd [#allocation4], %s428
      %s431 = sshll.u32 [#allocation10], 4
      %s432 = int_to_ptr.vmem [resolvable:$true] %s431
      %434 = dma.vmem_to_hbm [thread:$0]  %s432, 128, %s7, [#allocation4]
    $region49: #{tpu_custom_call.1} parent=1 // pred_fallthru
      _
    // Predicated region
    $region50: #{tpu_custom_call.1} parent=1 // pred_check
      _
    $region51: #{tpu_custom_call.1} parent=1 // pred_check_branch
      %436 = sbr.rel (0) target = $region53
    $region52: #{tpu_custom_call.1} parent=1 // pred_region
      %437 = dma.done [#allocation4], 128
    $region53: #{tpu_custom_call.1} parent=1 // pred_fallthru
      _
    %438 = vsyncpa [#allocation3], 1
    %439 = vsyncpa [#allocation6], 1
    %440 = vsyncpa [#allocation9], 1
    %441 = vsyncpa [#allocation4], 1

</llo_original>
